<compile_context>
chip_gen: v7x
topology: tpu7x:2x2x1
jax: 0.10.0
libtpu: 0.0.40
codegen_flags: <defaults>
</compile_context>

<pallas_src>
import math

import jax
import jax.numpy as jnp
from jax.experimental import pallas as pl
from jax.experimental.pallas import tpu as pltpu

H1 = 50      # Hnet hidden width
H2 = 25      # dnet hidden width
LANES = 128  # one vreg row


def phs_kernel(x_ref, p_ref, out_ref):
    # ---- scalar state from SMEM ---------------------------------------
    x0 = x_ref[0]
    x1 = x_ref[1]
    x1_abs = jnp.abs(x1)

    # ---- packed parameters: one (8, 128) VMEM tile, zero-padded --------
    w1cols = p_ref[0:2, :]   # rows: W1[:, 0], W1[:, 1]   lanes [0, 50)
    w1c0 = p_ref[0:1, :]     # W1[:, 0]
    w1c1 = p_ref[1:2, :]     # W1[:, 1]
    b1   = p_ref[2:3, :]     # b1
    w2   = p_ref[3:4, :]     # W2 row          (0 in padding lanes)
    wd1  = p_ref[4:5, :]     # dnet W1 col     lanes [0, 25)
    bd1  = p_ref[5:6, :]     # dnet b1
    wd2  = p_ref[6:7, :]     # dnet W2 row     (0 in padding lanes)
    bd2  = p_ref[7:8, 0:1]   # dnet b2         (1, 1)

    # ---- Hnet hidden layer: scalar-broadcast FMAs on the VPU, tanh on EUP
    h = jnp.tanh(x0 * w1c0 + x1 * w1c1 + b1)              # (1, 128)

    # Analytic gradient dH/dx = ((1 - h^2) * W2) @ W1, done as one elementwise
    # product broadcast against both W1 columns and a single cross-lane
    # reduction (XLU) over a (2, 128) tile.  Padding lanes contribute 0
    # because w2 (and the W1 columns) are zero there.
    g = (1.0 - h * h) * w2                                # (1, 128)
    dhd = jnp.sum(g * w1cols, axis=-1, keepdims=True)     # (2, 1) = [dH/dx0; dH/dx1]
    dhdx0 = dhd[0:1, 0:1]                                 # (1, 1)
    dhdx1 = dhd[1:2, 0:1]                                 # (1, 1)

    # ---- damping net: sd = dnet(|x1|) -----------------------------------
    s1 = jnp.tanh(x1_abs * wd1 + bd1)                     # (1, 128)
    sd = jnp.sum(s1 * wd2, axis=-1, keepdims=True) + bd2  # (1, 1)

    # ---- assemble vector field into one lane-contiguous row, one store --
    dx0 = dhdx1
    dx1 = -dhdx0 - sd * sd * dhdx1
    lane = jax.lax.broadcasted_iota(jnp.int32, (1, 2), 1)
    out_ref[...] = jnp.where(lane == 0, dx0, dx1)         # (1, 2)


def pack_params(params):
    """One-time layout of all parameters into a single zero-padded (8, 128)
    float32 tile (one vreg tile -> one input DMA).  Zero padding makes the
    in-kernel cross-lane reductions correct without masks."""
    w1, b1, w2, _b2, wd1, bd1, wd2, bd2 = params  # b2 only affects H (unused)
    p = jnp.zeros((8, LANES), jnp.float32)
    p = p.at[0, :H1].set(w1[:, 0])
    p = p.at[1, :H1].set(w1[:, 1])
    p = p.at[2, :H1].set(b1)
    p = p.at[3, :H1].set(w2.reshape(H1))
    p = p.at[4, :H2].set(wd1.reshape(H2))
    p = p.at[5, :H2].set(bd1)
    p = p.at[6, :H2].set(wd2.reshape(H2))
    p = p.at[7, 0].set(bd2[0])
    return p


def phs_func(t, x, packed_params):
    """Pallas implementation of PHS_Func.forward(t, x).

    `packed_params` must come from pack_params(), built once outside the hot
    path so no per-call transposes/reshapes of weights are executed."""
    del t  # unused, matching the torch module
    out = pl.pallas_call(
        phs_kernel,
        out_shape=jax.ShapeDtypeStruct((1, 2), jnp.float32),
        in_specs=[
            pl.BlockSpec(memory_space=pltpu.MemorySpace.SMEM),   # state scalars
            pl.BlockSpec(memory_space=pltpu.MemorySpace.VMEM),   # packed params
        ],
        out_specs=pl.BlockSpec(memory_space=pltpu.MemorySpace.VMEM),
    )(x.reshape(2), packed_params)
    return out.reshape(2, 1)


phs_forward = jax.jit(phs_func)


def init_params(key):
    """Deterministic PyTorch-Linear-style init (uniform ±1/sqrt(fan_in))."""
    def linear(k, out_f, in_f):
        kw, kb = jax.random.split(k)
        bound = 1.0 / math.sqrt(in_f)
        w = jax.random.uniform(kw, (out_f, in_f), jnp.float32, -bound, bound)
        b = jax.random.uniform(kb, (out_f,), jnp.float32, -bound, bound)
        return w, b

    k1, k2, k3, k4 = jax.random.split(key, 4)
    w1, b1 = linear(k1, H1, 2)    # Hnet  Linear(2, 50)
    w2, b2 = linear(k2, 1, H1)    # Hnet  Linear(50, 1)
    wd1, bd1 = linear(k3, H2, 1)  # dnet  Linear(1, 25)
    wd2, bd2 = linear(k4, 1, H2)  # dnet  Linear(25, 1)
    return (w1, b1, w2, b2, wd1, bd1, wd2, bd2)


def phs_ref(t, x, params):
    """Pure-JAX reference mirroring the torch forward, for verification."""
    del t
    (w1, b1, w2, _b2, wd1, bd1, wd2, bd2) = params
    xv = x.reshape(2)
    h = jnp.tanh(w1 @ xv + b1)                            # (50,)
    dhdx = ((1.0 - h * h) * w2.reshape(H1)) @ w1          # (2,)
    s1 = jnp.tanh(wd1.reshape(H2) * jnp.abs(xv[1]) + bd1)
    sd = jnp.dot(wd2.reshape(H2), s1) + bd2[0]
    dx0 = dhdx[1]
    dx1 = -dhdx[0] - sd * sd * dhdx[1]
    return jnp.stack([dx0, dx1]).reshape(2, 1)


if __name__ == "__main__":
    key = jax.random.PRNGKey(0)
    pkey, xkey = jax.random.split(key)
    params = init_params(pkey)
    packed = jax.block_until_ready(pack_params(params))  # one-time param prep

    x = jax.random.normal(xkey, (2, 1), jnp.float32)  # state column (q, p)
    t = jnp.float32(0.0)                              # unused by the module

    dx = phs_forward(t, x, packed)
    dx = jax.block_until_ready(dx)

    ref = phs_ref(t, x, params)
    assert dx.shape == (2, 1) and dx.dtype == jnp.float32
    assert jnp.allclose(dx, ref, atol=1e-5, rtol=1e-5), (dx, ref)
    print("KERNEL_OK")
</pallas_src>

<mosaic_0001>
module attributes {stable_mosaic.version = 11 : i64} {
  func.func @phs_kernel(%arg0: memref<2xf32, #tpu.memory_space<smem>>, %arg1: memref<8x128xf32, #tpu.memory_space<vmem>>, %arg2: memref<1x2xf32, #tpu.memory_space<vmem>>) attributes {dimension_semantics = [], scalar_prefetch = 0 : i64, scratch_operands = 0 : i64, tpu.core_type = #tpu.core_type<tc>} {
    %c0 = arith.constant 0 : index
    %0 = memref.load %arg0[%c0] : memref<2xf32, #tpu.memory_space<smem>>
    %c1 = arith.constant 1 : index
    %1 = memref.load %arg0[%c1] : memref<2xf32, #tpu.memory_space<smem>>
    %2 = math.absf %1 : f32
    %c0_0 = arith.constant 0 : index
    %c0_1 = arith.constant 0 : index
    %3 = vector.load %arg1[%c0_0, %c0_1] : memref<8x128xf32, #tpu.memory_space<vmem>>, vector<2x128xf32>
    %c0_2 = arith.constant 0 : index
    %c0_3 = arith.constant 0 : index
    %4 = vector.load %arg1[%c0_2, %c0_3] : memref<8x128xf32, #tpu.memory_space<vmem>>, vector<1x128xf32>
    %c1_4 = arith.constant 1 : index
    %c0_5 = arith.constant 0 : index
    %5 = vector.load %arg1[%c1_4, %c0_5] : memref<8x128xf32, #tpu.memory_space<vmem>>, vector<1x128xf32>
    %c2 = arith.constant 2 : index
    %c0_6 = arith.constant 0 : index
    %6 = vector.load %arg1[%c2, %c0_6] : memref<8x128xf32, #tpu.memory_space<vmem>>, vector<1x128xf32>
    %c3 = arith.constant 3 : index
    %c0_7 = arith.constant 0 : index
    %7 = vector.load %arg1[%c3, %c0_7] : memref<8x128xf32, #tpu.memory_space<vmem>>, vector<1x128xf32>
    %c4 = arith.constant 4 : index
    %c0_8 = arith.constant 0 : index
    %8 = vector.load %arg1[%c4, %c0_8] : memref<8x128xf32, #tpu.memory_space<vmem>>, vector<1x128xf32>
    %c5 = arith.constant 5 : index
    %c0_9 = arith.constant 0 : index
    %9 = vector.load %arg1[%c5, %c0_9] : memref<8x128xf32, #tpu.memory_space<vmem>>, vector<1x128xf32>
    %c6 = arith.constant 6 : index
    %c0_10 = arith.constant 0 : index
    %10 = vector.load %arg1[%c6, %c0_10] : memref<8x128xf32, #tpu.memory_space<vmem>>, vector<1x128xf32>
    %c7 = arith.constant 7 : index
    %c0_11 = arith.constant 0 : index
    %11 = vector.load %arg1[%c7, %c0_11] : memref<8x128xf32, #tpu.memory_space<vmem>>, vector<1x1xf32>
    %12 = vector.broadcast %0 : f32 to vector<1x128xf32>
    %13 = arith.mulf %12, %4 : vector<1x128xf32>
    %14 = vector.broadcast %1 : f32 to vector<1x128xf32>
    %15 = arith.mulf %14, %5 : vector<1x128xf32>
    %16 = arith.addf %13, %15 : vector<1x128xf32>
    %17 = arith.addf %16, %6 : vector<1x128xf32>
    %18 = math.tanh %17 : vector<1x128xf32>
    %19 = arith.mulf %18, %18 : vector<1x128xf32>
    %cst = arith.constant 1.000000e+00 : f32
    %20 = vector.broadcast %cst : f32 to vector<1x128xf32>
    %21 = arith.subf %20, %19 : vector<1x128xf32>
    %22 = arith.mulf %21, %7 : vector<1x128xf32>
    %23 = vector.broadcast %22 : vector<1x128xf32> to vector<2x128xf32>
    %24 = arith.mulf %23, %3 : vector<2x128xf32>
    %cst_12 = arith.constant dense<0.000000e+00> : vector<2xf32>
    %25 = vector.multi_reduction <add>, %24, %cst_12 [1] : vector<2x128xf32> to vector<2xf32>
    %26 = vector.shape_cast %25 : vector<2xf32> to vector<2x1xf32>
    %27 = vector.extract_strided_slice %26 {offsets = [0, 0], sizes = [1, 1], strides = [1, 1]} : vector<2x1xf32> to vector<1x1xf32>
    %28 = vector.extract_strided_slice %26 {offsets = [1, 0], sizes = [1, 1], strides = [1, 1]} : vector<2x1xf32> to vector<1x1xf32>
    %29 = vector.broadcast %2 : f32 to vector<1x128xf32>
    %30 = arith.mulf %29, %8 : vector<1x128xf32>
    %31 = arith.addf %30, %9 : vector<1x128xf32>
    %32 = math.tanh %31 : vector<1x128xf32>
    %33 = arith.mulf %32, %10 : vector<1x128xf32>
    %cst_13 = arith.constant dense<0.000000e+00> : vector<1xf32>
    %34 = vector.multi_reduction <add>, %33, %cst_13 [1] : vector<1x128xf32> to vector<1xf32>
    %35 = vector.shape_cast %34 : vector<1xf32> to vector<1x1xf32>
    %36 = arith.addf %35, %11 : vector<1x1xf32>
    %cst_14 = arith.constant 0.000000e+00 : f32
    %37 = vector.broadcast %cst_14 : f32 to vector<1x1xf32>
    %38 = arith.subf %37, %27 : vector<1x1xf32>
    %39 = arith.mulf %36, %36 : vector<1x1xf32>
    %40 = arith.mulf %39, %28 : vector<1x1xf32>
    %41 = arith.subf %38, %40 : vector<1x1xf32>
    %42 = tpu.iota {dimensions = array<i32: 1>} : vector<1x2xi32>
    %c0_i32 = arith.constant 0 : i32
    %43 = vector.broadcast %c0_i32 : i32 to vector<1x2xi32>
    %44 = arith.cmpi eq, %42, %43 : vector<1x2xi32>
    %45 = vector.shape_cast %28 : vector<1x1xf32> to vector<1x1xf32>
    %46 = vector.broadcast %45 : vector<1x1xf32> to vector<1x2xf32>
    %47 = vector.shape_cast %41 : vector<1x1xf32> to vector<1x1xf32>
    %48 = vector.broadcast %47 : vector<1x1xf32> to vector<1x2xf32>
    %49 = arith.select %44, %46, %48 : vector<1x2xi1>, vector<1x2xf32>
    %c0_15 = arith.constant 0 : index
    %c0_16 = arith.constant 0 : index
    %50 = vector.load %arg2[%c0_15, %c0_16] : memref<1x2xf32, #tpu.memory_space<vmem>>, vector<1x2xf32>
    tpu.vector_store %arg2[%c0_15, %c0_16], %49 {strides = array<i32>} : memref<1x2xf32, #tpu.memory_space<vmem>>, vector<1x2xf32>,
    return
  }
}

</mosaic_0001>

<llo_original>
// kernel: phs_func.1
$region0: #{phs_func.1}
  #allocation0 [shape = 'u32[]', space=smem, size = 0x4, offset = 0x4, fixed_abs, tag = 'smem constant byte address 0x4 - core index']
  #allocation1 [shape = 'u32[144,128]{1,0:T(1,128)}', space=vmem, size = 0x12000, scoped, tag = 'internal scratch']
  %s0 = inlined_call_operand.vmem [shape: f32[2], index: 0, kind: input, shape index: {}]
  %s1 = inlined_call_operand.hbm [shape: f32[8,128], index: 1, kind: input, shape index: {}]
  %s2 = inlined_call_operand.hbm [shape: f32[1,2], index: 2, kind: output, shape index: {}]
  %s3 = sld [smem:[#allocation0]]
  $region26: #{phs_func.1} parent=0
    _
  %s5 = ssub.s32 1, %s3
  %s6 = scalar_select 0, %s5, %s3
  $region1: #{phs_func.1} parent=0
    #allocation2 [shape = 'u8[512]{0}', space=smem, size = 0x200, scoped, tag = 'input window, operand 0, single buffered']
    #allocation3 [shape = 's32[1]{0}', space=sflag, size = 0x4, scoped, tag = 'scoped memory for phs_func.1']
    #allocation4 [shape = 's32[1]{0}', space=sflag, size = 0x4, scoped, tag = 'scoped memory for phs_func.1']
    #allocation5 [shape = 's32[1]{0}', space=sflag, size = 0x4, scoped, tag = 'scoped memory for phs_func.1']
    #allocation6 [shape = 'u8[4096]{0}', space=vmem, size = 0x1000, scoped, tag = 'input window, operand 1, single buffered']
    #allocation7 [shape = 'u8[512]{0}', space=vmem, size = 0x400, scoped, tag = 'output window, operand 0, single buffered']
    %7 = vsyncpa [#allocation5], 0
    %8 = vsyncpa [#allocation3], 0
    %9 = vsyncpa [#allocation4], 0
    // Predicated region
    $region2: #{phs_func.1} parent=1 // pred_check
      _
    $region3: #{phs_func.1} parent=1 // pred_check_branch
      %11 = sbr.rel (0) target = $region5
    $region4: #{phs_func.1} parent=1 // pred_region
      %s13 = ssub.s32 16, 16
      %14 = vsyncadd [#allocation5], %s13
      %s16 = sshll.u32 %s0, 4
      %s17 = int_to_ptr.vmem [resolvable:$true] %s16
      %19 = dma.vmem_to_smem %s17, 16, [#allocation2], [#allocation5]
    $region5: #{phs_func.1} parent=1 // pred_fallthru
      _
    // Predicated region
    $region6: #{phs_func.1} parent=1 // pred_check
      _
    $region7: #{phs_func.1} parent=1 // pred_check_branch
      %21 = sbr.rel (0) target = $region9
    $region8: #{phs_func.1} parent=1 // pred_region
      %s23 = ssub.s32 128, 128
      %24 = vsyncadd [#allocation3], %s23
      %s26 = sshll.u32 [#allocation6], 4
      %s27 = int_to_ptr.vmem [resolvable:$true] %s26
      %29 = dma.hbm_to_vmem [thread:$0]  %s1, 128, %s27, [#allocation3]
    $region9: #{phs_func.1} parent=1 // pred_fallthru
      _
    // Predicated region
    $region10: #{phs_func.1} parent=1 // pred_check
      _
    $region11: #{phs_func.1} parent=1 // pred_check_branch
      %31 = sbr.rel (0) target = $region13
    $region12: #{phs_func.1} parent=1 // pred_region
      %32 = dma.done [#allocation5], 16
    $region13: #{phs_func.1} parent=1 // pred_fallthru
      _
    // Predicated region
    $region14: #{phs_func.1} parent=1 // pred_check
      _
    $region15: #{phs_func.1} parent=1 // pred_check_branch
      %34 = sbr.rel (0) target = $region17
    $region16: #{phs_func.1} parent=1 // pred_region
      %35 = dma.done [#allocation3], 128
    $region17: #{phs_func.1} parent=1 // pred_fallthru
      _
    %36 = sfence
    %s37 = sld [smem:[#allocation2]]
    %s38 = sld [smem:[#allocation2 + $0x1]]
    %s39 = sand.u32 2147483647, %s38
    %v40 = vld [vmem:[#allocation6] sm:$0x3]
    %v41 = vld [vmem:[#allocation6] sm:$0x1]
    %v42 = vld [vmem:[#allocation6 + $0x1] sm:$0x1]
    %v43 = vld [vmem:[#allocation6 + $0x2] sm:$0x1]
    %v44 = vld [vmem:[#allocation6 + $0x3] sm:$0x1]
    %v45 = vld [vmem:[#allocation6 + $0x4] sm:$0x1]
    %v46 = vld [vmem:[#allocation6 + $0x5] sm:$0x1]
    %v47 = vld [vmem:[#allocation6 + $0x6] sm:$0x1]
    %v48 = vld [vmem:[#allocation6 + $0x7] sm:$0x1]
    %v49 = vstv %s37
    %v50 = vmul.f32 %v49, %v41
    %v51 = vstv %s38
    %v52 = vmul.f32 %v51, %v42
    %v53 = vadd.f32 %v50, %v52
    %v54 = vadd.f32 %v53, %v43
    %v55 = vtanh.pop %v54
    %v56 = vmul.f32 %v55, %v55
    %v57 = vsub.f32 1.0, %v56
    %v58 = vmul.f32 %v57, %v44
    %v59 = vlaneseq
    %v60 = vshrl.u32 %v59, 7
    %v61 = vsub.s32 0, %v60
    %v62 = vrot.slane %v58, %v61
    %v63 = vmul.f32 %v62, %v40
    %vm64 = vcmask 1041408
    %v65 = vsel %vm64, %v63, 0.0
    %66 = vadd.xlane.f32.xlu0 %v65
    %v67 = vpop.xlane.xlu0 %66
    %v68 = vstv %s39
    %v69 = vmul.f32 %v68, %v45
    %v70 = vadd.f32 %v69, %v46
    %v71 = vtanh.pop %v70
    %v72 = vmul.f32 %v71, %v47
    %vm73 = vcmask 1040384
    %v74 = vsel %vm73, %v72, 0.0
    %75 = vadd.xlane.f32.xlu0 %v74
    %v76 = vpop.xlane.xlu0 %75
    %v77 = vadd.f32 %v76, %v48
    %v78 = vsub.f32 0.0, %v67
    %v79 = vmul.f32 %v77, %v77
    %v81 = vrot.slane %v67, 1
    %v83 = vmul.f32 %v79, %v81
    %v84 = vsub.f32 %v78, %v83
    %v85 = vlaneseq
    %v86 = vand.u32 %v85, 127
    %vm87 = vcmp.eq.s32.totalorder %v86, 0
    %89 = vset.pattern.permute.xlu0 0
    %90 = vperm.xlu0 %89, %v84
    %v91 = vpop.permute.xlu0 %90
    %v92 = vrot.slane %v91, 7
    %v94 = vsel %vm87, %v67, %v92
    %vm95 = vcmask 9217
    %96 = vst.msk [vmem:[#allocation7 - $0x1] sm:$0x2] %vm95, %v94
    // Predicated region
    $region18: #{phs_func.1} parent=1 // pred_check
      _
    $region19: #{phs_func.1} parent=1 // pred_check_branch
      %98 = sbr.rel (0) target = $region21
    $region20: #{phs_func.1} parent=1 // pred_region
      %s100 = ssub.s32 16, 16
      %101 = vsyncadd [#allocation4], %s100
      %s103 = sshll.u32 [#allocation7], 4
      %s104 = int_to_ptr.vmem [resolvable:$true] %s103
      %106 = dma.vmem_to_hbm [thread:$0]  %s104, 16, %s2, [#allocation4]
    $region21: #{phs_func.1} parent=1 // pred_fallthru
      _
    // Predicated region
    $region22: #{phs_func.1} parent=1 // pred_check
      _
    $region23: #{phs_func.1} parent=1 // pred_check_branch
      %108 = sbr.rel (0) target = $region25
    $region24: #{phs_func.1} parent=1 // pred_region
      %109 = dma.done [#allocation4], 16
    $region25: #{phs_func.1} parent=1 // pred_fallthru
      _
    %110 = vsyncpa [#allocation3], 1
    %111 = vsyncpa [#allocation4], 1
    %112 = vsyncpa [#allocation5], 1

</llo_original>
